<compile_context>
chip_gen: v7x
topology: tpu7x:2x2x1
jax: 0.10.0
libtpu: 0.0.40
codegen_flags: <defaults>
</compile_context>

<pallas_src>
import jax
import jax.numpy as jnp
from jax import lax
from jax.experimental import pallas as pl
from jax.experimental.pallas import tpu as pltpu


def _round_up(x, m):
    return ((x + m - 1) // m) * m


# ----------------------------------------------------------------------------
# Pallas kernel 1: plain linear projection  y = x @ W^T + b   (l_source / l_target)
# ----------------------------------------------------------------------------
def _linear_kernel(x_ref, w_ref, b_ref, o_ref):
    # x_ref: (1, S, Hin)   w_ref: (Hin, Hout)   b_ref: (1, Hout)   o_ref: (1, S, Hout)
    y = jnp.dot(x_ref[0].astype(jnp.bfloat16), w_ref[...].astype(jnp.bfloat16),
                preferred_element_type=jnp.float32)
    o_ref[0] = (y + b_ref[...]).astype(o_ref.dtype)


def pallas_linear(x, w, b):
    """x: (B, S, Hin); w: (Hout, Hin) PyTorch layout; b: (Hout,) -> (B, S, Hout)."""
    B, S, Hin = x.shape
    Hout = w.shape[0]
    wt = jnp.transpose(w)              # (Hin, Hout) so the kernel does a plain matmul
    b2 = b.reshape(1, Hout)
    return pl.pallas_call(
        _linear_kernel,
        out_shape=jax.ShapeDtypeStruct((B, S, Hout), x.dtype),
        grid_spec=pltpu.PrefetchScalarGridSpec(
            num_scalar_prefetch=0,
            grid=(B,),
            in_specs=[
                pl.BlockSpec((1, S, Hin), lambda i: (i, 0, 0)),
                pl.BlockSpec((Hin, Hout), lambda i: (0, 0)),
                pl.BlockSpec((1, Hout), lambda i: (0, 0)),
            ],
            out_specs=pl.BlockSpec((1, S, Hout), lambda i: (i, 0, 0)),
        ),
        compiler_params=pltpu.CompilerParams(dimension_semantics=("parallel",)),
    )(x, wt, b2)


# ----------------------------------------------------------------------------
# Pallas kernel 2: relation head = hoisted base matmul + low-rank correction
# ----------------------------------------------------------------------------
def _relation_kernel(hsrc_ref, hidt_ref, l_ref, rt_ref, o_ref, base_ref):
    # hsrc_ref: (1, Ss_p, H)       h_source, batch b (rows >= Ss are zero padding)
    # hidt_ref: (1, H, St_p)       hidden^T, batch b (cols >= St are zero padding)
    # l_ref   : (1, 1, Ss_p, C_p)  packed left low-rank factors for (b, r)
    # rt_ref  : (1, 1, C_p, St_p)  packed right low-rank factors (already transposed)
    # o_ref   : (1, 1, Ss_p, St_p)
    # base_ref: (Ss_p, St_p) f32 VMEM scratch carrying hsrc @ hid^T across the r axis
    r = pl.program_id(1)

    @pl.when(r == 0)
    def _():
        base_ref[...] = jnp.dot(hsrc_ref[0].astype(jnp.bfloat16),
                                hidt_ref[0].astype(jnp.bfloat16),
                                preferred_element_type=jnp.float32)

    corr = jnp.dot(l_ref[0, 0].astype(jnp.bfloat16),
                   rt_ref[0, 0].astype(jnp.bfloat16),
                   preferred_element_type=jnp.float32)
    o_ref[0, 0] = (base_ref[...] + corr).astype(o_ref.dtype)


def relation_logits_pallas(src, h_source, hidden,
                           lora_src_a, lora_src_b, lora_tgt_a, lora_tgt_b):
    """Fused relation head.

    src:        (B, Ss, H)   raw source_hidden_state
    h_source:   (B, Ss, H)   l_source output
    hidden:     (B, St, H)   decoder-refined target hidden states
    lora_*_a/b: (H, rank, R) LoRA factors   (delta[h,i,l] = sum_k A[h,k,l] * B[i,k,l])
    Returns (B, R, Ss, St) relation logits.
    """
    B, Ss, H = src.shape
    St = hidden.shape[1]
    rank, R = lora_src_a.shape[1], lora_src_a.shape[2]

    # --- per-batch packed low-rank projections (XLA; tiny vs. the base matmul) -------
    # logits[b,r] = hsrc @ hid^T
    #            + (hsrc @ B_t_r) (hid @ A_t_r)^T
    #            + (src  @ A_s_r) (hid @ B_s_r)^T
    #            + (src  @ A_s_r) (B_s_r^T B_t_r) (hid @ A_t_r)^T
    P_s = jnp.einsum('bsh,hkr->bsrk', src,      lora_src_a)   # (B, Ss, R, rank)
    V_t = jnp.einsum('bsh,hkr->bsrk', h_source, lora_tgt_b)   # (B, Ss, R, rank)
    Q_t = jnp.einsum('bth,hkr->btrk', hidden,   lora_tgt_a)   # (B, St, R, rank)
    U_s = jnp.einsum('bth,hkr->btrk', hidden,   lora_src_b)   # (B, St, R, rank)
    M   = jnp.einsum('hkr,hmr->rkm', lora_src_b, lora_tgt_b)  # (R, rank, rank)
    PM  = jnp.einsum('bsrk,rkm->bsrm', P_s, M)                # (B, Ss, R, rank)

    L  = jnp.concatenate([V_t, P_s, PM], axis=-1)             # (B, Ss, R, 3*rank)
    Rf = jnp.concatenate([Q_t, U_s, Q_t], axis=-1)            # (B, St, R, 3*rank)
    L  = jnp.transpose(L,  (0, 2, 1, 3))                      # (B, R, Ss, C)
    Rt = jnp.transpose(Rf, (0, 2, 3, 1))                      # (B, R, C, St)

    C = 3 * rank
    C_p  = _round_up(C, 8)
    Ss_p = _round_up(Ss, 8)
    St_p = _round_up(St, 128)                                 # lane-dense output stores

    hsrc_p = jnp.pad(h_source, ((0, 0), (0, Ss_p - Ss), (0, 0)))
    hidt_p = jnp.pad(jnp.transpose(hidden, (0, 2, 1)),        # hoist the transpose once
                     ((0, 0), (0, 0), (0, St_p - St)))        # (B, H, St_p)
    L_p  = jnp.pad(L,  ((0, 0), (0, 0), (0, Ss_p - Ss), (0, C_p - C)))
    Rt_p = jnp.pad(Rt, ((0, 0), (0, 0), (0, C_p - C), (0, St_p - St)))

    out_p = pl.pallas_call(
        _relation_kernel,
        out_shape=jax.ShapeDtypeStruct((B, R, Ss_p, St_p), src.dtype),
        grid_spec=pltpu.PrefetchScalarGridSpec(
            num_scalar_prefetch=0,
            grid=(B, R),
            in_specs=[
                pl.BlockSpec((1, Ss_p, H),      lambda b, r: (b, 0, 0)),     # hsrc (r-invariant)
                pl.BlockSpec((1, H, St_p),      lambda b, r: (b, 0, 0)),     # hid^T (r-invariant)
                pl.BlockSpec((1, 1, Ss_p, C_p), lambda b, r: (b, r, 0, 0)),  # packed L
                pl.BlockSpec((1, 1, C_p, St_p), lambda b, r: (b, r, 0, 0)),  # packed R^T
            ],
            out_specs=pl.BlockSpec((1, 1, Ss_p, St_p), lambda b, r: (b, r, 0, 0)),
            scratch_shapes=[pltpu.VMEM((Ss_p, St_p), jnp.float32)],
        ),
        compiler_params=pltpu.CompilerParams(
            dimension_semantics=("parallel", "arbitrary"),
            vmem_limit_bytes=48 * 1024 * 1024,
        ),
    )(hsrc_p, hidt_p, L_p, Rt_p)
    return out_p[:, :, :Ss, :St]


# ----------------------------------------------------------------------------
# Assumed decoder-layer stack (plain JAX — class source not provided in the spec)
# ----------------------------------------------------------------------------
def _layer_norm(x, gamma, beta, eps):
    mu = jnp.mean(x, axis=-1, keepdims=True)
    var = jnp.mean((x - mu) ** 2, axis=-1, keepdims=True)
    return (x - mu) * lax.rsqrt(var + eps) * gamma + beta


def _mha(q_in, kv_in, p, num_heads):
    B, S, H = q_in.shape
    T = kv_in.shape[1]
    d = H // num_heads
    q = (q_in @ p["wq"].T + p["bq"]).reshape(B, S, num_heads, d)
    k = (kv_in @ p["wk"].T + p["bk"]).reshape(B, T, num_heads, d)
    v = (kv_in @ p["wv"].T + p["bv"]).reshape(B, T, num_heads, d)
    scores = jnp.einsum("bqhd,bkhd->bhqk", q, k) / (d ** 0.5)
    attn = jax.nn.softmax(scores, axis=-1)
    ctx = jnp.einsum("bhqk,bkhd->bqhd", attn, v).reshape(B, S, H)
    return ctx @ p["wo"].T + p["bo"]


def _decoder_layer(hidden, text, p, num_heads, eps):
    # TODO(synk): GroundingDinoDecoderLayer definition not in the spec; assumed
    # self-attn -> add&LN -> cross-attn(text) -> add&LN -> FFN -> add&LN, run as XLA ops.
    g1, b1 = p["ln1"]
    g2, b2 = p["ln2"]
    g3, b3 = p["ln3"]
    h = _layer_norm(hidden + _mha(hidden, hidden, p["self_attn"], num_heads), g1, b1, eps)
    h = _layer_norm(h + _mha(h, text, p["cross_attn"], num_heads), g2, b2, eps)
    w1, bb1 = p["fc1"]
    w2, bb2 = p["fc2"]
    ffn = jax.nn.relu(h @ w1.T + bb1) @ w2.T + bb2
    return _layer_norm(h + ffn, g3, b3, eps)


# ----------------------------------------------------------------------------
# Full module forward (Pallas path) and pure-JAX reference
# ----------------------------------------------------------------------------
def grounding_dino_mm_ref_heads(source_hidden_state, target_hidden_state, params,
                                num_heads, eps):
    h_source = pallas_linear(source_hidden_state, params["w_src"], params["b_src"])
    h_target = pallas_linear(target_hidden_state, params["w_tgt"], params["b_tgt"])
    hidden = h_target
    for lp in params["layers"]:
        hidden = _layer_norm(_decoder_layer(hidden, h_source, lp, num_heads, eps),
                             params["ln_gamma"], params["ln_beta"], eps)
    return relation_logits_pallas(
        source_hidden_state, h_source, hidden,
        params["lora_src_a"], params["lora_src_b"],
        params["lora_tgt_a"], params["lora_tgt_b"])


def _reference(source_hidden_state, target_hidden_state, params, num_heads, eps):
    h_source = source_hidden_state @ params["w_src"].T + params["b_src"]
    h_target = target_hidden_state @ params["w_tgt"].T + params["b_tgt"]
    hidden = h_target
    for lp in params["layers"]:
        hidden = _layer_norm(_decoder_layer(hidden, h_source, lp, num_heads, eps),
                             params["ln_gamma"], params["ln_beta"], eps)
    # LoRADelta(): delta[h, i, l] = sum_k A[h, k, l] * B[i, k, l]
    d_src = jnp.einsum("hkl,ikl->hil", params["lora_src_a"], params["lora_src_b"])
    d_tgt = jnp.einsum("hkl,ikl->hil", params["lora_tgt_a"], params["lora_tgt_b"])
    source_out = h_source[:, :, None, :] + jnp.einsum("bsh,hil->bsli",
                                                      source_hidden_state, d_src)
    target_out = hidden[:, :, None, :] + jnp.einsum("bsh,hil->bsli", hidden, d_tgt)
    a = jnp.transpose(source_out, (0, 2, 1, 3))   # (B, R, Ss, H)
    b = jnp.transpose(target_out, (0, 2, 1, 3))   # (B, R, St, H)
    return jnp.einsum("blsh,blth->blst", a, b)    # calc_4d_dot_product


# ----------------------------------------------------------------------------
# Deterministic parameter construction
# ----------------------------------------------------------------------------
def _init_linear(key, out_dim, in_dim):
    k1, k2 = jax.random.split(key)
    bound = 1.0 / (in_dim ** 0.5)
    w = jax.random.uniform(k1, (out_dim, in_dim), jnp.float32, -bound, bound)
    b = jax.random.uniform(k2, (out_dim,), jnp.float32, -bound, bound)
    return w, b


def _init_attn(key, H):
    ks = jax.random.split(key, 4)
    wq, bq = _init_linear(ks[0], H, H)
    wk, bk = _init_linear(ks[1], H, H)
    wv, bv = _init_linear(ks[2], H, H)
    wo, bo = _init_linear(ks[3], H, H)
    return dict(wq=wq, bq=bq, wk=wk, bk=bk, wv=wv, bv=bv, wo=wo, bo=bo)


def _init_decoder_layer(key, H, ffn):
    ks = jax.random.split(key, 4)
    ones, zeros = jnp.ones((H,), jnp.float32), jnp.zeros((H,), jnp.float32)
    return dict(
        self_attn=_init_attn(ks[0], H),
        cross_attn=_init_attn(ks[1], H),
        fc1=_init_linear(ks[2], ffn, H),
        fc2=_init_linear(ks[3], H, ffn),
        ln1=(ones, zeros), ln2=(ones, zeros), ln3=(ones, zeros),
    )


def init_params(key, H_src, H_tgt, num_relations, rank, num_layers, ffn):
    H = H_src  # output_size = source_hidden_size
    ks = jax.random.split(key, 6 + num_layers)
    w_src, b_src = _init_linear(ks[0], H, H_src)
    w_tgt, b_tgt = _init_linear(ks[1], H, H_tgt)
    bound = 1.0 / (H ** 0.5)
    lora_src_a = jax.random.uniform(ks[2], (H, rank, num_relations), jnp.float32, -bound, bound)
    lora_src_b = jax.random.uniform(ks[3], (H, rank, num_relations), jnp.float32, -bound, bound)
    lora_tgt_a = jax.random.uniform(ks[4], (H, rank, num_relations), jnp.float32, -bound, bound)
    lora_tgt_b = jax.random.uniform(ks[5], (H, rank, num_relations), jnp.float32, -bound, bound)
    layers = [_init_decoder_layer(ks[6 + i], H, ffn) for i in range(num_layers)]
    return dict(
        w_src=w_src, b_src=b_src, w_tgt=w_tgt, b_tgt=b_tgt,
        lora_src_a=lora_src_a, lora_src_b=lora_src_b,
        lora_tgt_a=lora_tgt_a, lora_tgt_b=lora_tgt_b,
        ln_gamma=jnp.ones((H,), jnp.float32), ln_beta=jnp.zeros((H,), jnp.float32),
        layers=layers,
    )


if __name__ == "__main__":
    # Small shapes consistent with the module: batch=2, seq=8, hidden=32, R=4, rank=2.
    B, S, H, R = 2, 8, 32, 4
    RANK, HEADS, LAYERS, FFN = 2, 8, 2, 64
    EPS = 1e-6

    key = jax.random.PRNGKey(0)
    k_src, k_tgt, k_params = jax.random.split(key, 3)
    source_hidden_state = jax.random.normal(k_src, (B, S, H), dtype=jnp.float32)
    target_hidden_state = jax.random.normal(k_tgt, (B, S, H), dtype=jnp.float32)
    params = init_params(k_params, H, H, R, RANK, LAYERS, FFN)

    out = grounding_dino_mm_ref_heads(source_hidden_state, target_hidden_state,
                                      params, HEADS, EPS)
    out = jax.block_until_ready(out)

    ref = _reference(source_hidden_state, target_hidden_state, params, HEADS, EPS)
    assert out.shape == (B, R, S, S), out.shape
    # bf16 MXU operands + base/low-rank reassociation change numerics slightly;
    # validate with a scale-relative bound.
    max_err = float(jnp.max(jnp.abs(out - ref)))
    scale = float(jnp.max(jnp.abs(ref))) + 1e-6
    assert max_err <= 5e-2 * scale + 1e-3, (max_err, scale)

    print("KERNEL_OK")
</pallas_src>

<mosaic_0001>
module attributes {stable_mosaic.version = 11 : i64} {
  func.func @_linear_kernel(%arg0: i32, %arg1: memref<1x8x32xf32, #tpu.memory_space<vmem>>, %arg2: memref<32x32xf32, #tpu.memory_space<vmem>>, %arg3: memref<1x32xf32, #tpu.memory_space<vmem>>, %arg4: memref<1x8x32xf32, #tpu.memory_space<vmem>>) attributes {dimension_semantics = [#tpu.dimension_semantics<parallel>], iteration_bounds = array<i64: 2>, scalar_prefetch = 0 : i64, scratch_operands = 0 : i64, tpu.core_type = #tpu.core_type<tc>, window_params = [{transform_indices = @transform_0, window_bounds = array<i64: 1, 8, 32>}, {pipeline_mode = #tpu.pipeline_mode<synchronous>, transform_indices = @transform_1, window_bounds = array<i64: 32, 32>}, {pipeline_mode = #tpu.pipeline_mode<synchronous>, transform_indices = @transform_2, window_bounds = array<i64: 1, 32>}, {transform_indices = @transform_3, window_bounds = array<i64: 1, 8, 32>}]} {
    %c0 = arith.constant 0 : index
    %c0_0 = arith.constant 0 : index
    %c0_1 = arith.constant 0 : index
    %0 = vector.load %arg1[%c0, %c0_0, %c0_1] : memref<1x8x32xf32, #tpu.memory_space<vmem>>, vector<1x8x32xf32>
    %1 = vector.shape_cast %0 : vector<1x8x32xf32> to vector<8x32xf32>
    %2 = arith.truncf %1 : vector<8x32xf32> to vector<8x32xbf16>
    %c0_2 = arith.constant 0 : index
    %c0_3 = arith.constant 0 : index
    %3 = vector.load %arg2[%c0_2, %c0_3] : memref<32x32xf32, #tpu.memory_space<vmem>>, vector<32x32xf32>
    %4 = arith.truncf %3 : vector<32x32xf32> to vector<32x32xbf16>
    %cst = arith.constant dense<0.000000e+00> : vector<8x32xf32>
    %5 = tpu.matmul %2, %4, %cst {dimension_numbers = #tpu.dot_dimension_numbers<[1], [0], [0], [1], [0, 0, 1, 1], [], []>} : vector<8x32xbf16>, vector<32x32xbf16>, vector<8x32xf32> -> vector<8x32xf32>
    %c0_4 = arith.constant 0 : index
    %c0_5 = arith.constant 0 : index
    %6 = vector.load %arg3[%c0_4, %c0_5] : memref<1x32xf32, #tpu.memory_space<vmem>>, vector<1x32xf32>
    %7 = vector.broadcast %6 : vector<1x32xf32> to vector<8x32xf32>
    %8 = arith.addf %5, %7 : vector<8x32xf32>
    %c0_6 = arith.constant 0 : index
    %c0_7 = arith.constant 0 : index
    %c0_8 = arith.constant 0 : index
    %9 = vector.load %arg4[%c0_6, %c0_7, %c0_8] : memref<1x8x32xf32, #tpu.memory_space<vmem>>, vector<1x8x32xf32>
    %10 = vector.shape_cast %9 : vector<1x8x32xf32> to vector<8x32xf32>
    %11 = vector.shape_cast %8 : vector<8x32xf32> to vector<1x8x32xf32>
    tpu.vector_store %arg4[%c0_6, %c0_7, %c0_8], %11 {strides = array<i32>} : memref<1x8x32xf32, #tpu.memory_space<vmem>>, vector<1x8x32xf32>,
    return
  }
  func.func @transform_0(%arg0: i32) -> (i32, i32, i32) {
    %c0_i32 = arith.constant 0 : i32
    %c0_i32_0 = arith.constant 0 : i32
    %c0_i32_1 = arith.constant 0 : i32
    return %arg0, %c0_i32, %c0_i32_0 : i32, i32, i32
  }
  func.func @transform_1(%arg0: i32) -> (i32, i32) {
    %c0_i32 = arith.constant 0 : i32
    %c0_i32_0 = arith.constant 0 : i32
    %c0_i32_1 = arith.constant 0 : i32
    return %c0_i32, %c0_i32_0 : i32, i32
  }
  func.func @transform_2(%arg0: i32) -> (i32, i32) {
    %c0_i32 = arith.constant 0 : i32
    %c0_i32_0 = arith.constant 0 : i32
    %c0_i32_1 = arith.constant 0 : i32
    return %c0_i32, %c0_i32_0 : i32, i32
  }
  func.func @transform_3(%arg0: i32) -> (i32, i32, i32) {
    %c0_i32 = arith.constant 0 : i32
    %c0_i32_0 = arith.constant 0 : i32
    %c0_i32_1 = arith.constant 0 : i32
    return %arg0, %c0_i32, %c0_i32_0 : i32, i32, i32
  }
}

</mosaic_0001>

<llo_original>
// kernel: tpu_custom_call.1
$region0: #{tpu_custom_call.1}
  #allocation0 [shape = 'u32[]', space=smem, size = 0x4, offset = 0x4, fixed_abs, tag = 'smem constant byte address 0x4 - core index']
  #allocation1 [shape = 'u32[144,128]{1,0:T(1,128)}', space=vmem, size = 0x12000, scoped, tag = 'internal scratch']
  %s0 = inlined_call_operand.hbm [shape: f32[2,8,32], index: 0, kind: input, shape index: {}]
  %s1 = inlined_call_operand.hbm [shape: f32[32,32], index: 1, kind: input, shape index: {}]
  %s2 = inlined_call_operand.vmem [shape: f32[1,32], index: 2, kind: input, shape index: {}]
  %s3 = inlined_call_operand.hbm [shape: f32[2,8,32], index: 3, kind: output, shape index: {}]
  %s4 = sld [smem:[#allocation0]]
  $region53: #{tpu_custom_call.1} parent=0
    _
  %s6 = ssub.s32 1, %s4
  %s7 = scalar_select 0, %s6, %s4
  $region1: #{tpu_custom_call.1} parent=0
    #allocation2 [shape = 'u8[8192]{0}', space=vmem, size = 0x2000, scoped, tag = 'input window, operand 0']
    #allocation3 [shape = 's32[2]{0}', space=sflag, size = 0x8, scoped, tag = 'scoped memory for tpu_custom_call.1']
    #allocation4 [shape = 's32[2]{0}', space=sflag, size = 0x8, scoped, tag = 'scoped memory for tpu_custom_call.1']
    #allocation5 [shape = 'u8[16384]{0}', space=vmem, size = 0x4000, scoped, tag = 'input window, operand 1, single buffered']
    #allocation6 [shape = 's32[1]{0}', space=sflag, size = 0x4, scoped, tag = 'scoped memory for tpu_custom_call.1']
    #allocation7 [shape = 'u8[8192]{0}', space=vmem, size = 0x2000, scoped, tag = 'output window, operand 0']
    %8 = vsyncpa [#allocation3], 0
    %s9 = scalar_lea.sflag [#allocation3], 1
    %10 = vsyncpa %s9, 0
    %11 = vsyncpa [#allocation6], 0
    %12 = vsyncpa [#allocation4], 0
    %s13 = scalar_lea.sflag [#allocation4], 1
    %14 = vsyncpa %s13, 0
    loop: start=0, step=1, limit=4
    $region2: #{tpu_custom_call.1} parent=1 // loop_pre_header
      _
    $region3: #{tpu_custom_call.1} parent=1 // loop_header
      %s16 = sphi 0, %s20
      %p17 = scmp.ge.s32.totalorder %s16, 4
      %s26 = sphi 0, %s28
      %s29 = sphi 0, %s26
      %s30 = sphi 0, %s29
      %s46 = sphi 0, %s30
      %s50 = sphi 0, %s50
      %s52 = sphi 0, %s50
      %s53 = sphi 0, %s52
      %s67 = sphi 0, %s53
      %s71 = sphi 0, %s71
      %s73 = sphi 0, %s71
      %s74 = sphi 0, %s73
      %s88 = sphi 0, %s74
      %s94 = sphi 0, %s96
      %s97 = sphi 0, %s94
      %s98 = sphi 0, %s97
      %s114 = sphi 0, %s98
    $region4: #{tpu_custom_call.1} parent=1 // loop_header_branch
      %19 = sbr.rel (%p17) target = $region8
    $region5: #{tpu_custom_call.1} parent=1 // loop_body
      %s21 = ssub.s32 %s16, 1
      %s22 = ssub.s32 %s16, 2
      %s23 = sadd.s32 %s16, 1
      %s24 = ssub.s32 %s16, %s23
      %p25 = scmp.eq.s32.totalorder %s24, 0
      %s27 = sadd.s32 %s26, 1
      %s28 = scalar_select %p25, %s26, %s27
      %p31 = pneg %p25
      %p32 = scmp.eq.s32.totalorder %s16, 1
      %p33 = por %p31, %p32
      %p34 = scmp.ne.s32.totalorder %s26, %s29
      %p35 = scmp.eq.s32.totalorder %s16, 0
      %p36 = por %p34, %p35
      %p37 = scmp.ne.s32.totalorder %s26, %s29
      %p38 = scmp.eq.s32.totalorder %s21, 1
      %p39 = por %p37, %p38
      %p40 = scmp.ne.s32.totalorder %s29, %s30
      %p41 = scmp.eq.s32.totalorder %s21, 0
      %p42 = por %p40, %p41
      %p43 = scmp.ne.s32.totalorder %s29, %s30
      %p44 = scmp.eq.s32.totalorder %s22, 1
      %p45 = por %p43, %p44
      %p47 = scmp.ne.s32.totalorder %s30, %s46
      %p48 = scmp.eq.s32.totalorder %s22, 0
      %p49 = por %p47, %p48
      %s51 = sadd.s32 %s50, 1
      %p54 = scmp.eq.s32.totalorder %s16, 1
      %p55 = scmp.ne.s32.totalorder %s50, %s52
      %p56 = scmp.eq.s32.totalorder %s16, 0
      %p57 = por %p55, %p56
      %p58 = scmp.ne.s32.totalorder %s50, %s52
      %p59 = scmp.eq.s32.totalorder %s21, 1
      %p60 = por %p58, %p59
      %p61 = scmp.ne.s32.totalorder %s52, %s53
      %p62 = scmp.eq.s32.totalorder %s21, 0
      %p63 = por %p61, %p62
      %p64 = scmp.ne.s32.totalorder %s52, %s53
      %p65 = scmp.eq.s32.totalorder %s22, 1
      %p66 = por %p64, %p65
      %p68 = scmp.ne.s32.totalorder %s53, %s67
      %p69 = scmp.eq.s32.totalorder %s22, 0
      %p70 = por %p68, %p69
      %s72 = sadd.s32 %s71, 1
      %p75 = scmp.eq.s32.totalorder %s16, 1
      %p76 = scmp.ne.s32.totalorder %s71, %s73
      %p77 = scmp.eq.s32.totalorder %s16, 0
      %p78 = por %p76, %p77
      %p79 = scmp.ne.s32.totalorder %s71, %s73
      %p80 = scmp.eq.s32.totalorder %s21, 1
      %p81 = por %p79, %p80
      %p82 = scmp.ne.s32.totalorder %s73, %s74
      %p83 = scmp.eq.s32.totalorder %s21, 0
      %p84 = por %p82, %p83
      %p85 = scmp.ne.s32.totalorder %s73, %s74
      %p86 = scmp.eq.s32.totalorder %s22, 1
      %p87 = por %p85, %p86
      %p89 = scmp.ne.s32.totalorder %s74, %s88
      %p90 = scmp.eq.s32.totalorder %s22, 0
      %p91 = por %p89, %p90
      %s92 = ssub.s32 %s16, %s23
      %p93 = scmp.eq.s32.totalorder %s92, 0
      %s95 = sadd.s32 %s94, 1
      %s96 = scalar_select %p93, %s94, %s95
      %p99 = pneg %p93
      %p100 = scmp.eq.s32.totalorder %s16, 1
      %p101 = por %p99, %p100
      %p102 = scmp.ne.s32.totalorder %s94, %s97
      %p103 = scmp.eq.s32.totalorder %s16, 0
      %p104 = por %p102, %p103
      %p105 = scmp.ne.s32.totalorder %s94, %s97
      %p106 = scmp.eq.s32.totalorder %s21, 1
      %p107 = por %p105, %p106
      %p108 = scmp.ne.s32.totalorder %s97, %s98
      %p109 = scmp.eq.s32.totalorder %s21, 0
      %p110 = por %p108, %p109
      %p111 = scmp.ne.s32.totalorder %s97, %s98
      %p112 = scmp.eq.s32.totalorder %s22, 1
      %p113 = por %p111, %p112
      %p115 = scmp.ne.s32.totalorder %s98, %s114
      %p116 = scmp.eq.s32.totalorder %s22, 0
      %p117 = por %p115, %p116
      %p118 = scmp.le.s32.totalorder 1, %s16
      %p119 = scmp.lt.s32.totalorder %s16, 3
      %p120 = pnand %p118, %p119
      %p121 = pneg %p120
      // Predicated region
      $region9: #{tpu_custom_call.1} parent=5 // pred_check
        _
      $region10: #{tpu_custom_call.1} parent=5 // pred_check_branch
        %123 = sbr.rel (%p120) target = $region12
      $region11: #{tpu_custom_call.1} parent=5 // pred_region
        %s124 = ssub.s32 %s16, 1
        // Predicated region
        $region13: #{tpu_custom_call.1} parent=11 // pred_check
          %p125 = pneg %p63
        $region14: #{tpu_custom_call.1} parent=11 // pred_check_branch
          %127 = sbr.rel (%p125) target = $region16
        $region15: #{tpu_custom_call.1} parent=11 // pred_region
          %s129 = ssub.s32 512, 512
          %130 = vsyncadd [#allocation6], %s129
          %s131 = sshll.u32 [#allocation5], 4
          %s132 = int_to_ptr.vmem [resolvable:$true] %s131
          %137 = dma.hbm_to_vmem [thread:$0]  %s1, 512, %s132, [#allocation6], 128, 128, 8
        $region16: #{tpu_custom_call.1} parent=11 // pred_fallthru
          _
        // Predicated region
        $region17: #{tpu_custom_call.1} parent=11 // pred_check
          %p138 = pneg %p84
        $region18: #{tpu_custom_call.1} parent=11 // pred_check_branch
          %140 = sbr.rel (%p138) target = $region20
        $region19: #{tpu_custom_call.1} parent=11 // pred_region
          _
        $region20: #{tpu_custom_call.1} parent=11 // pred_fallthru
          _
      $region12: #{tpu_custom_call.1} parent=5 // pred_fallthru
        _
      %p141 = scmp.lt.s32.totalorder %s16, 2
      // Predicated region
      $region21: #{tpu_custom_call.1} parent=5 // pred_check
        %p142 = pneg %p141
      $region22: #{tpu_custom_call.1} parent=5 // pred_check_branch
        %144 = sbr.rel (%p142) target = $region24
      $region23: #{tpu_custom_call.1} parent=5 // pred_region
        // Predicated region
        $region25: #{tpu_custom_call.1} parent=23 // pred_check
          %p145 = pneg %p36
        $region26: #{tpu_custom_call.1} parent=23 // pred_check_branch
          %147 = sbr.rel (%p145) target = $region28
        $region27: #{tpu_custom_call.1} parent=23 // pred_region
          %s148 = sand.u32 %s26, 1
          %s149 = scalar_lea.sflag [#allocation3], %s148
          %s150 = sand.u32 %s26, 1
          %s151 = smul.addr %s150, 8
          %s152 = scalar_lea.vmem [#allocation2], %s151
          %s154 = ssub.s32 128, 128
          %155 = vsyncadd %s149, %s154
          %s156 = smul.addr %s16, 128
          %s157 = scalar_lea.hbm %s0, %s156
          %s159 = sshll.u32 %s152, 4
          %s160 = int_to_ptr.vmem [resolvable:$true] %s159
          %162 = dma.hbm_to_vmem [thread:$0]  %s157, 128, %s160, %s149
        $region28: #{tpu_custom_call.1} parent=23 // pred_fallthru
          _
      $region24: #{tpu_custom_call.1} parent=5 // pred_fallthru
        _
      %p163 = scmp.le.s32.totalorder 1, %s16
      %p164 = scmp.lt.s32.totalorder %s16, 3
      %p165 = pnand %p163, %p164
      %p166 = pneg %p165
      // Predicated region
      $region29: #{tpu_custom_call.1} parent=5 // pred_check
        _
      $region30: #{tpu_custom_call.1} parent=5 // pred_check_branch
        %168 = sbr.rel (%p165) target = $region32
      $region31: #{tpu_custom_call.1} parent=5 // pred_region
        %s169 = ssub.s32 %s16, 1
        %s170 = sand.u32 %s29, 1
        %s171 = scalar_lea.sflag [#allocation3], %s170
        %s172 = sand.u32 %s29, 1
        %s173 = smul.addr %s172, 8
        %s174 = scalar_lea.vmem [#allocation2], %s173
        // Predicated region
        $region33: #{tpu_custom_call.1} parent=31 // pred_check
          %p175 = pneg %p42
        $region34: #{tpu_custom_call.1} parent=31 // pred_check_branch
          %177 = sbr.rel (%p175) target = $region36
        $region35: #{tpu_custom_call.1} parent=31 // pred_region
          %178 = dma.done %s171, 128
        $region36: #{tpu_custom_call.1} parent=31 // pred_fallthru
          _
        // Predicated region
        $region37: #{tpu_custom_call.1} parent=31 // pred_check
          %p179 = pneg %p63
        $region38: #{tpu_custom_call.1} parent=31 // pred_check_branch
          %181 = sbr.rel (%p179) target = $region40
        $region39: #{tpu_custom_call.1} parent=31 // pred_region
          %182 = dma.done [#allocation6], 512
        $region40: #{tpu_custom_call.1} parent=31 // pred_fallthru
          _
        %s183 = sand.u32 %s29, 1
        %s184 = scalar_lea.sflag [#allocation3], %s183
        %s185 = sand.u32 %s29, 1
        %s186 = smul.addr %s185, 8
        %s187 = scalar_lea.vmem [#allocation2], %s186
        %p188 = pneg %p42
        %p189 = pneg %p39
        %p190 = pneg %p63
        %p191 = pneg %p60
        %p192 = pneg %p84
        %p193 = pneg %p81
        %p194 = pneg %p110
        %p195 = pneg %p107
        %s196 = sand.u32 %s97, 1
        %s197 = scalar_lea.sflag [#allocation4], %s196
        %s198 = sand.u32 %s97, 1
        %s199 = smul.addr %s198, 8
        %s200 = scalar_lea.vmem [#allocation7], %s199
        %v202 = vld [vmem:[%s174] sm:$0xff]
        %v203 = vpack.c.bf16 %v202, %v202
        %v204 = vld [vmem:[#allocation5] sm:$0xff]
        %v205 = vld [vmem:[#allocation5 + $0x8] sm:$0xff]
        %v206 = vld [vmem:[#allocation5 + $0x10] sm:$0xff]
        %v207 = vld [vmem:[#allocation5 + $0x18] sm:$0xff]
        %v208 = vpack.c.bf16 %v205, %v204
        %v209 = vpack.c.bf16 %v207, %v206
        %v210 = vld [vmem:[%s2] sm:$0x1]
        %v212 = vlaneseq
        %v213 = vshrl.u32 %v212, 7
        %v214 = vsub.s32 0, %v213
        %v215 = vrot.slane %v210, %v214
        %vm217 = vcmask 261120
        %v219 = vsel %vm217, %v203, 0
        %221 = vmatprep.subr.bf16.mxu0 0
        %222 = vmatpush1.bf16.msra.mxu0 %v208
        %223 = vmatprep.subr.bf16.mxu0 0
        %224 = vmatpush1.bf16.msra.mxu0 %v209
        %225 = vmatprep.subr.bf16.mxu0 0
        %226 = vmatpush1.bf16.msra.mxu0 0
        %227 = vmatprep.subr.bf16.mxu0 0
        %228 = vmatpush1.bf16.msra.mxu0 0
        %229 = vmatprep.subr.bf16.mxu0 0
        %230 = vmatpush1.bf16.msra.mxu0 0
        %231 = vmatprep.subr.bf16.mxu0 0
        %232 = vmatpush1.bf16.msra.mxu0 0
        %233 = vmatprep.subr.bf16.mxu0 0
        %234 = vmatpush1.bf16.msra.mxu0 0
        %235 = vmatprep.subr.bf16.mxu0 0
        %236 = vmatpush1.bf16.msra.mxu0 0
        %237 = vmatprep.subr.bf16.mxu0 0
        %238 = vmatpush1.bf16.msra.mxu0 0
        %239 = vmatprep.subr.bf16.mxu0 0
        %240 = vmatpush1.bf16.msra.mxu0 0
        %241 = vmatprep.subr.bf16.mxu0 0
        %242 = vmatpush1.bf16.msra.mxu0 0
        %243 = vmatprep.subr.bf16.mxu0 0
        %244 = vmatpush1.bf16.msra.mxu0 0
        %245 = vmatprep.subr.bf16.mxu0 0
        %246 = vmatpush1.bf16.msra.mxu0 0
        %247 = vmatprep.subr.bf16.mxu0 0
        %248 = vmatpush1.bf16.msra.mxu0 0
        %249 = vmatprep.subr.bf16.mxu0 0
        %250 = vmatpush1.bf16.msra.mxu0 0
        %251 = vmatprep.subr.bf16.mxu0 0
        %252 = vmatpush1.bf16.msra.mxu0 0
        %253 = vmatprep.mubr.bf16.mxu0 0
        %254 = vmatmul.mubr.bf16.gmra.mrb[0].mxu0 %v219
        %v255 = vpop.f32.mrb[0].mxu0
        %v256 = vadd.f32 %v215, %v255
        %v257 = vpop.f32.mrb[0].mxu0
        %v258 = vpop.f32.mrb[0].mxu0
        %v259 = vpop.f32.mrb[0].mxu0
        %260 = vdwg.mxu0
        %261 = vst.msk [vmem:[%s200] sm:$0xff] %vm217, %v256
        %s262 = sand.u32 %s97, 1
        %s263 = scalar_lea.sflag [#allocation4], %s262
        %s264 = sand.u32 %s97, 1
        %s265 = smul.addr %s264, 8
        %s266 = scalar_lea.vmem [#allocation7], %s265
        // Predicated region
        $region41: #{tpu_custom_call.1} parent=31 // pred_check
          %p267 = pneg %p107
        $region42: #{tpu_custom_call.1} parent=31 // pred_check_branch
          %269 = sbr.rel (%p267) target = $region44
        $region43: #{tpu_custom_call.1} parent=31 // pred_region
          %s271 = ssub.s32 128, 128
          %272 = vsyncadd %s263, %s271
          %s273 = smul.addr %s21, 128
          %s274 = scalar_lea.hbm %s3, %s273
          %s276 = sshll.u32 %s266, 4
          %s277 = int_to_ptr.vmem [resolvable:$true] %s276
          %279 = dma.vmem_to_hbm [thread:$0]  %s277, 128, %s274, %s263
        $region44: #{tpu_custom_call.1} parent=31 // pred_fallthru
          _
      $region32: #{tpu_custom_call.1} parent=5 // pred_fallthru
        _
      %p280 = scmp.le.s32.totalorder 2, %s16
      // Predicated region
      $region45: #{tpu_custom_call.1} parent=5 // pred_check
        %p281 = pneg %p280
      $region46: #{tpu_custom_call.1} parent=5 // pred_check_branch
        %283 = sbr.rel (%p281) target = $region48
      $region47: #{tpu_custom_call.1} parent=5 // pred_region
        %s284 = ssub.s32 %s16, 2
        // Predicated region
        $region49: #{tpu_custom_call.1} parent=47 // pred_check
          %p285 = pneg %p113
        $region50: #{tpu_custom_call.1} parent=47 // pred_check_branch
          %287 = sbr.rel (%p285) target = $region52
        $region51: #{tpu_custom_call.1} parent=47 // pred_region
          %s288 = sand.u32 %s98, 1
          %s289 = scalar_lea.sflag [#allocation4], %s288
          %s290 = sand.u32 %s98, 1
          %s291 = smul.addr %s290, 8
          %s292 = scalar_lea.vmem [#allocation7], %s291
          %293 = dma.done %s289, 128
        $region52: #{tpu_custom_call.1} parent=47 // pred_fallthru
          _
      $region48: #{tpu_custom_call.1} parent=5 // pred_fallthru
        _
    $region6: #{tpu_custom_call.1} parent=1 // loop_footer
      %s20 = sadd.s32 1, %s16
    $region7: #{tpu_custom_call.1} parent=1 // loop_footer_branch
      %15 = sbr.rel target = $region3
    $region8: #{tpu_custom_call.1} parent=1 // loop_exit
      _
    %294 = vsyncpa [#allocation3], 1
    %s295 = scalar_lea.sflag [#allocation3], 1
    %296 = vsyncpa %s295, 1
    %297 = vsyncpa [#allocation6], 1
    %298 = vsyncpa [#allocation4], 1
    %s299 = scalar_lea.sflag [#allocation4], 1
    %300 = vsyncpa %s299, 1

</llo_original>
